<compile_context>
chip_gen: v7x
topology: tpu7x:2x2x1
jax: 0.10.0
libtpu: 0.0.40
codegen_flags: <defaults>
</compile_context>

<pallas_src>
import functools
import math

import jax
import jax.numpy as jnp
from jax import lax
from jax.experimental import pallas as pl
from jax.experimental.pallas import tpu as pltpu

_EPS = 1e-5
_TILE_TARGET_BYTES = 4 * 1024 * 1024       # ~4 MiB pipelined block buffers
_TILED_VMEM_LIMIT = 32 * 1024 * 1024       # 2x in + 2x out 4 MiB buffers + temps


def _round_up(n, m):
    return ((n + m - 1) // m) * m


@functools.lru_cache(maxsize=None)
def _vmem_capacity_bytes():
    """Physical VMEM per TensorCore; conservative fallback if the query fails."""
    try:
        v = getattr(pltpu.get_tpu_info(), "vmem_capacity_bytes", None)
        if v:
            return int(v)
    except Exception:
        pass
    return 64 * 1024 * 1024                # assume v7x-sized VMEM when unknown


@functools.lru_cache(maxsize=None)
def _resident_plan():
    """(max slab bytes for the resident path, scoped VMEM limit for that path).
    Budget ~6x slab: 2x in + 2x out block buffers + f32 temps, with headroom."""
    cap = _vmem_capacity_bytes()
    if cap >= 96 * 1024 * 1024:            # v5e / v6e: 128 MiB physical VMEM
        return 14 * 1024 * 1024, 96 * 1024 * 1024
    return 7 * 1024 * 1024, 48 * 1024 * 1024   # v7x: 64 MiB per TensorCore


def _channel_onehot(rows, C):
    """(rows, C) bool mask m[r, c] = (r % C == c).  Callers guarantee that
    global_row % C == local_row % C (row tiles are multiples of C)."""
    rmod = lax.broadcasted_iota(jnp.int32, (rows, C), 0) % C
    col = lax.broadcasted_iota(jnp.int32, (rows, C), 1)
    return rmod == col


# ----------------------------------------------------------------------------- kernels


def _bn_resident_kernel(x_ref, g_ref, b_ref, o_ref, *, C, eps):
    """Single-block batchnorm on a channel-periodic row slab (R, W)."""
    R, W = x_ref.shape
    x = x_ref[...].astype(jnp.float32)
    inv_cnt = 1.0 / float((R // C) * W)                    # 1 / elements per channel

    if C == 1:
        # Fast path: no channel masks / per-row broadcasts at all.
        s = jnp.sum(jnp.sum(x, axis=1, keepdims=True), axis=0, keepdims=True)   # (1,1)
        mean = s * inv_cnt
        d = x - mean
        ss = jnp.sum(jnp.sum(d * d, axis=1, keepdims=True), axis=0, keepdims=True)
        var = ss * inv_cnt                                  # biased
        scale = g_ref[...] * lax.rsqrt(var + eps)           # (1,1)
        o_ref[...] = (d * scale + b_ref[...]).astype(o_ref.dtype)
        return

    m = _channel_onehot(R, C)                               # (R, C)

    def per_row(vec_1xC):                                   # (1, C) -> (R, 1) pick by channel
        v = jnp.broadcast_to(vec_1xC, (R, C))
        return jnp.sum(jnp.where(m, v, 0.0), axis=1, keepdims=True)

    row_sum = jnp.sum(x, axis=1, keepdims=True)                                    # (R, 1)
    mean = jnp.sum(jnp.where(m, row_sum, 0.0), axis=0, keepdims=True) * inv_cnt    # (1, C)
    d = x - per_row(mean)
    row_ss = jnp.sum(d * d, axis=1, keepdims=True)
    var = jnp.sum(jnp.where(m, row_ss, 0.0), axis=0, keepdims=True) * inv_cnt      # biased
    scale = g_ref[...] * lax.rsqrt(var + eps)                                      # (1, C)
    o_ref[...] = (d * per_row(scale) + per_row(b_ref[...])).astype(o_ref.dtype)


def _bn_stats_kernel(x_ref, sh0_ref, sum_ref, sq_ref, *,
                     C, tile_r, n_rows, half, needs_mask):
    """Phase 1: per-channel shifted sum / sum-of-squares over row tiles.
    Grid is (2, half): leading axis is 'parallel' (one half per TensorCore on
    v7x); each core accumulates into its own (8, C) partial."""
    i = pl.program_id(1)

    @pl.when(i == 0)
    def _init():
        sum_ref[...] = jnp.zeros_like(sum_ref)
        sq_ref[...] = jnp.zeros_like(sq_ref)

    x = x_ref[...].astype(jnp.float32)                      # (tile_r, W)

    # Shifted accumulation (shift0 ~ per-channel mean) avoids E[x^2]-E[x]^2
    # cancellation for data with |mean| >> std.
    if C == 1:
        d = x - jnp.full((1, 1), sh0_ref[0], jnp.float32)
    else:
        rmod = lax.broadcasted_iota(jnp.int32, (tile_r, 1), 0) % C
        sh = jnp.full((tile_r, 1), sh0_ref[0], jnp.float32)
        for c in range(1, C):
            sh = jnp.where(rmod == c, sh0_ref[c], sh)
        d = x - sh

    row_sum = jnp.sum(d, axis=1, keepdims=True)
    row_sq = jnp.sum(d * d, axis=1, keepdims=True)

    if needs_mask:
        # Mask rows past the end of the slab: either the partial last block or
        # the clamped duplicate tile of the odd-grid core-1 tail.
        t = pl.program_id(0) * half + i
        gid = lax.broadcasted_iota(jnp.int32, (tile_r, 1), 0) + t * tile_r
        valid = gid < n_rows
        row_sum = jnp.where(valid, row_sum, 0.0)
        row_sq = jnp.where(valid, row_sq, 0.0)

    if C == 1:
        chan_sum = jnp.sum(row_sum, axis=0, keepdims=True)  # (1, 1)
        chan_sq = jnp.sum(row_sq, axis=0, keepdims=True)
    else:
        m = _channel_onehot(tile_r, C)                      # tile_r % C == 0
        chan_sum = jnp.sum(jnp.where(m, row_sum, 0.0), axis=0, keepdims=True)
        chan_sq = jnp.sum(jnp.where(m, row_sq, 0.0), axis=0, keepdims=True)

    # (1, C) broadcasts across the 8-sublane accumulator block; every sublane
    # carries the same per-core partial, row 0 is read back in phase 2.
    sum_ref[...] += chan_sum
    sq_ref[...] += chan_sq


def _bn_normalize_kernel(x_ref, sums_ref, sqs_ref, sh0_ref, g_ref, b_ref, o_ref,
                         *, C, cnt, eps):
    """Phase 2: fused fold + normalize.  Stats / shift / gamma / beta arrive via
    SMEM; scale & shift are rebuilt per step with a few (tile_r, 1) vector ops
    (negligible vs the (tile_r, W) FMA), then y = x * scale[chan] + shift[chan]."""
    tile_r = x_ref.shape[0]
    x = x_ref[...].astype(jnp.float32)
    inv_cnt = 1.0 / cnt

    vshape = (1, 1) if C == 1 else (tile_r, 1)
    rmod = None if C == 1 else lax.broadcasted_iota(jnp.int32, vshape, 0) % C

    def pick(read_c):                                       # per-channel scalar -> per-row vec
        v = jnp.full(vshape, read_c(0), jnp.float32)
        for c in range(1, C):
            v = jnp.where(rmod == c, read_c(c), v)
        return v

    # Core-0 partial lives at flat index c, core-1 partial at 8*C + c.
    s = pick(lambda c: sums_ref[c]) + pick(lambda c: sums_ref[8 * C + c])
    q = pick(lambda c: sqs_ref[c]) + pick(lambda c: sqs_ref[8 * C + c])
    sh0 = pick(lambda c: sh0_ref[c])
    g = pick(lambda c: g_ref[c])
    b = pick(lambda c: b_ref[c])

    mean = s * inv_cnt                                      # mean of (x - shift0)
    var = jnp.maximum(q * inv_cnt - mean * mean, 0.0)       # biased
    scale = g * lax.rsqrt(var + eps)
    shift = b - (mean + sh0) * scale
    o_ref[...] = (x * scale + shift).astype(o_ref.dtype)


def _bn_nc_kernel(x_ref, g_ref, b_ref, o_ref, *, eps):
    """(N, C) BatchNorm1d: channels on the lane axis, reduce over sublanes."""
    x = x_ref[...].astype(jnp.float32)
    mean = jnp.mean(x, axis=0, keepdims=True)
    d = x - mean
    var = jnp.mean(d * d, axis=0, keepdims=True)
    o_ref[...] = (d * (g_ref[...] * lax.rsqrt(var + eps)) + b_ref[...]).astype(o_ref.dtype)


# ----------------------------------------------------------------------------- wrappers


def _bn_rows(x2, C, gamma, beta, eps=_EPS):
    """BatchNorm on a channel-periodic row slab X2[R, W] (row r -> channel r % C)."""
    R, W = x2.shape
    assert R % C == 0, "channel-periodic slab must satisfy R % C == 0"
    itemsize = x2.dtype.itemsize
    gamma = gamma.astype(jnp.float32).reshape(C)
    beta = beta.astype(jnp.float32).reshape(C)
    raw = R * W * itemsize
    resident_bytes, resident_limit = _resident_plan()

    if raw <= resident_bytes:
        # Resident path: one HBM read + one write, exact centered two-pass stats.
        # TODO(synk): near the top of this range, stream tiles through an inner
        # pltpu.emit_pipeline to overlap read/compute/write of the single block.
        return pl.pallas_call(
            functools.partial(_bn_resident_kernel, C=C, eps=eps),
            out_shape=jax.ShapeDtypeStruct((R, W), x2.dtype),
            grid=(1,),
            in_specs=[
                pl.BlockSpec((R, W), lambda i: (0, 0)),
                pl.BlockSpec((1, C), lambda i: (0, 0)),
                pl.BlockSpec((1, C), lambda i: (0, 0)),
            ],
            out_specs=pl.BlockSpec((R, W), lambda i: (0, 0)),
            compiler_params=pltpu.CompilerParams(
                dimension_semantics=("arbitrary",),
                vmem_limit_bytes=resident_limit),
        )(x2, gamma.reshape(1, C), beta.reshape(1, C))

    # ---- tiled two-phase plan ----
    # Row tiles of ~_TILE_TARGET_BYTES, multiple of lcm(sublane_pack, C) rows so
    # (a) sublane tiling is satisfied and (b) local row % C == global row % C.
    sub = max(8, 32 // itemsize)                     # 8 (f32) / 16 (bf16) / 32 (int8)
    align = (sub * C) // math.gcd(sub, C)
    tile_r = max(align, (_TILE_TARGET_BYTES // max(1, W * itemsize)) // align * align)
    tile_r = min(tile_r, _round_up(R, align))
    grid_r = pl.cdiv(R, tile_r)
    half = pl.cdiv(grid_r, 2)                        # tiles per TensorCore in phase 1
    needs_mask = (2 * half != grid_r) or (grid_r * tile_r != R)
    # TODO(synk): if a single row (W) is itself multi-MiB, also tile the lane axis.

    # Cheap per-channel center (rows 0..C-1 map to channels 0..C-1) for
    # cancellation-safe shifted accumulation.
    w0 = min(W, 1024)
    shift0 = jnp.mean(x2[:C, :w0].astype(jnp.float32), axis=1)          # (C,)

    def stats_x_map(p, i):
        # Clamp the possibly out-of-range last slot of core 1 when grid_r is odd;
        # its rows are zeroed in-kernel via the global-row mask.
        return (jnp.minimum(p * half + i, grid_r - 1), 0)

    # Phase 1: per-channel shifted sum / sum-of-squares.  Leading axis splits
    # the tiles across both v7x TensorCores; reduction axis last, "arbitrary".
    sums, sqs = pl.pallas_call(
        functools.partial(_bn_stats_kernel, C=C, tile_r=tile_r, n_rows=R,
                          half=half, needs_mask=needs_mask),
        out_shape=(
            jax.ShapeDtypeStruct((16, C), jnp.float32),    # 2 cores x 8 sublanes
            jax.ShapeDtypeStruct((16, C), jnp.float32),
        ),
        grid=(2, half),
        in_specs=[
            pl.BlockSpec((tile_r, W), stats_x_map),
            pl.BlockSpec(memory_space=pltpu.MemorySpace.SMEM),           # shift0
        ],
        out_specs=(
            pl.BlockSpec((8, C), lambda p, i: (p, 0)),
            pl.BlockSpec((8, C), lambda p, i: (p, 0)),
        ),
        compiler_params=pltpu.CompilerParams(
            dimension_semantics=("parallel", "arbitrary"),
            vmem_limit_bytes=_TILED_VMEM_LIMIT),
    )(x2, shift0)

    # Phase 2: the scale/shift fold is fused into the normalize kernel; all
    # per-channel scalars travel through SMEM (no per-step tiny DMAs, no extra
    # host-side op between the two pallas_calls).  Fully "parallel" grid.
    cnt = float((R // C) * W)
    return pl.pallas_call(
        functools.partial(_bn_normalize_kernel, C=C, cnt=cnt, eps=eps),
        out_shape=jax.ShapeDtypeStruct((R, W), x2.dtype),
        grid=(grid_r,),
        in_specs=[
            pl.BlockSpec((tile_r, W), lambda i: (i, 0)),
            pl.BlockSpec(memory_space=pltpu.MemorySpace.SMEM),           # sums (16*C,)
            pl.BlockSpec(memory_space=pltpu.MemorySpace.SMEM),           # sqs  (16*C,)
            pl.BlockSpec(memory_space=pltpu.MemorySpace.SMEM),           # shift0 (C,)
            pl.BlockSpec(memory_space=pltpu.MemorySpace.SMEM),           # gamma (C,)
            pl.BlockSpec(memory_space=pltpu.MemorySpace.SMEM),           # beta (C,)
        ],
        out_specs=pl.BlockSpec((tile_r, W), lambda i: (i, 0)),
        compiler_params=pltpu.CompilerParams(
            dimension_semantics=("parallel",),
            vmem_limit_bytes=_TILED_VMEM_LIMIT),
    )(x2, sums.reshape(16 * C), sqs.reshape(16 * C), shift0, gamma, beta)


def _bn_nc(x, gamma, beta, eps=_EPS):
    N, C = x.shape
    # TODO(synk): resident-only; tile over N with the two-phase plan if (N, 3) gets huge.
    return pl.pallas_call(
        functools.partial(_bn_nc_kernel, eps=eps),
        out_shape=jax.ShapeDtypeStruct((N, C), x.dtype),
        grid=(1,),
        in_specs=[
            pl.BlockSpec((N, C), lambda i: (0, 0)),
            pl.BlockSpec((1, C), lambda i: (0, 0)),
            pl.BlockSpec((1, C), lambda i: (0, 0)),
        ],
        out_specs=pl.BlockSpec((N, C), lambda i: (0, 0)),
        compiler_params=pltpu.CompilerParams(
            dimension_semantics=("arbitrary",), vmem_limit_bytes=_TILED_VMEM_LIMIT),
    )(x, gamma.astype(jnp.float32).reshape(1, C), beta.astype(jnp.float32).reshape(1, C))


def _dense_view_c1(x):
    """Free (reshape-only) lane-dense 2-D view of a single-channel 4-D tensor.
    Wider rows first -> fewer cross-sublane reductions in the stats path."""
    M = x.size
    for w in (8192, 4096, 2048, 1024, 512, 256, 128):
        if M % w == 0 and M // w >= 8:
            return x.reshape(M // w, w)
    N, C, H, W = x.shape
    return x.reshape(N * C * H, W)


def init_params():
    # nn.BatchNorm1d(3): weight=(3,), bias=(3,);  nn.BatchNorm2d(1): weight=(1,), bias=(1,)
    # TODO(synk): running_mean / running_var buffers are updated in PyTorch training
    # mode but do not affect the forward output; they are not tracked here.
    return {
        "bn1_weight": jnp.ones((3,), jnp.float32),
        "bn1_bias": jnp.zeros((3,), jnp.float32),
        "bn2_weight": jnp.ones((1,), jnp.float32),
        "bn2_bias": jnp.zeros((1,), jnp.float32),
    }


def batchnorm_forward(x, params):
    if x.ndim == 4:
        N, C, H, W = x.shape
        assert C == 1, "BatchNorm2d in this module has num_features=1"
        x2 = _dense_view_c1(x)                     # pure reshape, no HBM transpose
        y2 = _bn_rows(x2, 1, params["bn2_weight"], params["bn2_bias"])
        return y2.reshape(N, C, H, W)
    elif x.ndim == 3:
        N, C, L = x.shape
        assert C == 3, "BatchNorm1d in this module has num_features=3"
        x2 = x.reshape(N * C, L)                   # pure reshape; row r -> channel r % C
        y2 = _bn_rows(x2, C, params["bn1_weight"], params["bn1_bias"])
        return y2.reshape(N, C, L)
    elif x.ndim == 2:
        N, C = x.shape
        assert C == 3, "BatchNorm1d in this module has num_features=3"
        return _bn_nc(x, params["bn1_weight"], params["bn1_bias"])
    # Mirror the PyTorch module: unsupported ranks return None.
    return None


def _reference(x, params):
    # pure-JAX reference of PyTorch training-mode batchnorm
    if x.ndim == 4:
        axes, g, b, shp = (0, 2, 3), params["bn2_weight"], params["bn2_bias"], (1, -1, 1, 1)
    elif x.ndim == 3:
        axes, g, b, shp = (0, 2), params["bn1_weight"], params["bn1_bias"], (1, -1, 1)
    else:
        axes, g, b, shp = (0,), params["bn1_weight"], params["bn1_bias"], (1, -1)
    mean = jnp.mean(x, axis=axes, keepdims=True)
    var = jnp.mean((x - mean) ** 2, axis=axes, keepdims=True)
    return (x - mean) / jnp.sqrt(var + _EPS) * g.reshape(shp) + b.reshape(shp)


if __name__ == "__main__":
    params = init_params()
    keys = jax.random.split(jax.random.PRNGKey(0), 7)

    cases = [
        # small inputs -> resident single-pass kernels
        jax.random.normal(keys[0], (2, 1, 16, 16), jnp.float32),    # BatchNorm2d(1)
        jax.random.normal(keys[1], (2, 3, 8), jnp.float32),         # BatchNorm1d(3), 3-D
        jax.random.normal(keys[2], (4, 3), jnp.float32),            # BatchNorm1d(3), 2-D
        jax.random.normal(keys[3], (8, 1, 256, 384), jnp.float32),  # ~3 MiB resident, wide rows
        jax.random.normal(keys[4], (4, 1, 512, 960), jnp.float32),  # ~7.5 MiB resident/tiled
        # larger inputs -> tiled two-phase path (2-core stats grid + parallel normalize)
        jax.random.normal(keys[5], (2, 1, 1152, 2048), jnp.float32),          # odd tile grid
        jax.random.normal(keys[6], (180, 3, 8192), jnp.float32) * 2.0 + 0.5,  # partial last tile
    ]

    for x in cases:
        y = jax.block_until_ready(batchnorm_forward(x, params))
        y_ref = _reference(x, params)
        assert y.shape == x.shape and y.dtype == x.dtype
        assert jnp.allclose(y, y_ref, atol=1e-3, rtol=1e-3), (
            f"mismatch for shape {x.shape}: "
            f"max_abs_err={float(jnp.max(jnp.abs(y - y_ref)))}")

    print("KERNEL_OK")
</pallas_src>

<mosaic_0001>
module attributes {stable_mosaic.version = 11 : i64} {
  func.func @_bn_resident_kernel(%arg0: i32, %arg1: memref<32x16xf32, #tpu.memory_space<vmem>>, %arg2: memref<1x1xf32, #tpu.memory_space<vmem>>, %arg3: memref<1x1xf32, #tpu.memory_space<vmem>>, %arg4: memref<32x16xf32, #tpu.memory_space<vmem>>) attributes {dimension_semantics = [#tpu.dimension_semantics<arbitrary>], iteration_bounds = array<i64: 1>, scalar_prefetch = 0 : i64, scratch_operands = 0 : i64, tpu.core_type = #tpu.core_type<tc>, window_params = [{pipeline_mode = #tpu.pipeline_mode<synchronous>, transform_indices = @transform_0, window_bounds = array<i64: 32, 16>}, {pipeline_mode = #tpu.pipeline_mode<synchronous>, transform_indices = @transform_1, window_bounds = array<i64: 1, 1>}, {pipeline_mode = #tpu.pipeline_mode<synchronous>, transform_indices = @transform_2, window_bounds = array<i64: 1, 1>}, {pipeline_mode = #tpu.pipeline_mode<synchronous>, transform_indices = @transform_3, window_bounds = array<i64: 32, 16>}]} {
    %c0 = arith.constant 0 : index
    %c0_0 = arith.constant 0 : index
    %0 = vector.load %arg1[%c0, %c0_0] : memref<32x16xf32, #tpu.memory_space<vmem>>, vector<32x16xf32>
    %cst = arith.constant dense<0.000000e+00> : vector<32xf32>
    %1 = vector.multi_reduction <add>, %0, %cst [1] : vector<32x16xf32> to vector<32xf32>
    %2 = vector.shape_cast %1 : vector<32xf32> to vector<32x1xf32>
    %cst_1 = arith.constant dense<0.000000e+00> : vector<1xf32>
    %3 = vector.multi_reduction <add>, %2, %cst_1 [0] : vector<32x1xf32> to vector<1xf32>
    %4 = vector.shape_cast %3 : vector<1xf32> to vector<1x1xf32>
    %cst_2 = arith.constant 0.001953125 : f32
    %5 = vector.broadcast %cst_2 : f32 to vector<1x1xf32>
    %6 = arith.mulf %4, %5 : vector<1x1xf32>
    %7 = vector.broadcast %6 : vector<1x1xf32> to vector<32x16xf32>
    %8 = arith.subf %0, %7 : vector<32x16xf32>
    %9 = arith.mulf %8, %8 : vector<32x16xf32>
    %cst_3 = arith.constant dense<0.000000e+00> : vector<32xf32>
    %10 = vector.multi_reduction <add>, %9, %cst_3 [1] : vector<32x16xf32> to vector<32xf32>
    %11 = vector.shape_cast %10 : vector<32xf32> to vector<32x1xf32>
    %cst_4 = arith.constant dense<0.000000e+00> : vector<1xf32>
    %12 = vector.multi_reduction <add>, %11, %cst_4 [0] : vector<32x1xf32> to vector<1xf32>
    %13 = vector.shape_cast %12 : vector<1xf32> to vector<1x1xf32>
    %cst_5 = arith.constant 0.001953125 : f32
    %14 = vector.broadcast %cst_5 : f32 to vector<1x1xf32>
    %15 = arith.mulf %13, %14 : vector<1x1xf32>
    %c0_6 = arith.constant 0 : index
    %c0_7 = arith.constant 0 : index
    %16 = vector.load %arg2[%c0_6, %c0_7] : memref<1x1xf32, #tpu.memory_space<vmem>>, vector<1x1xf32>
    %cst_8 = arith.constant 9.99999974E-6 : f32
    %17 = vector.broadcast %cst_8 : f32 to vector<1x1xf32>
    %18 = arith.addf %15, %17 : vector<1x1xf32>
    %19 = math.rsqrt %18 : vector<1x1xf32>
    %20 = arith.mulf %16, %19 : vector<1x1xf32>
    %21 = vector.broadcast %20 : vector<1x1xf32> to vector<32x16xf32>
    %22 = arith.mulf %8, %21 : vector<32x16xf32>
    %c0_9 = arith.constant 0 : index
    %c0_10 = arith.constant 0 : index
    %23 = vector.load %arg3[%c0_9, %c0_10] : memref<1x1xf32, #tpu.memory_space<vmem>>, vector<1x1xf32>
    %24 = vector.broadcast %23 : vector<1x1xf32> to vector<32x16xf32>
    %25 = arith.addf %22, %24 : vector<32x16xf32>
    %c0_11 = arith.constant 0 : index
    %c0_12 = arith.constant 0 : index
    %26 = vector.load %arg4[%c0_11, %c0_12] : memref<32x16xf32, #tpu.memory_space<vmem>>, vector<32x16xf32>
    tpu.vector_store %arg4[%c0_11, %c0_12], %25 {strides = array<i32>} : memref<32x16xf32, #tpu.memory_space<vmem>>, vector<32x16xf32>,
    return
  }
  func.func @transform_0(%arg0: i32) -> (i32, i32) {
    %c0_i32 = arith.constant 0 : i32
    %c0_i32_0 = arith.constant 0 : i32
    %c0_i32_1 = arith.constant 0 : i32
    return %c0_i32, %c0_i32_0 : i32, i32
  }
  func.func @transform_1(%arg0: i32) -> (i32, i32) {
    %c0_i32 = arith.constant 0 : i32
    %c0_i32_0 = arith.constant 0 : i32
    %c0_i32_1 = arith.constant 0 : i32
    return %c0_i32, %c0_i32_0 : i32, i32
  }
  func.func @transform_2(%arg0: i32) -> (i32, i32) {
    %c0_i32 = arith.constant 0 : i32
    %c0_i32_0 = arith.constant 0 : i32
    %c0_i32_1 = arith.constant 0 : i32
    return %c0_i32, %c0_i32_0 : i32, i32
  }
  func.func @transform_3(%arg0: i32) -> (i32, i32) {
    %c0_i32 = arith.constant 0 : i32
    %c0_i32_0 = arith.constant 0 : i32
    %c0_i32_1 = arith.constant 0 : i32
    return %c0_i32, %c0_i32_0 : i32, i32
  }
}

</mosaic_0001>

<llo_original>
// kernel: tpu_custom_call.1
$region0: #{tpu_custom_call.1}
  #allocation0 [shape = 'u32[]', space=smem, size = 0x4, offset = 0x4, fixed_abs, tag = 'smem constant byte address 0x4 - core index']
  #allocation1 [shape = 'u32[144,128]{1,0:T(1,128)}', space=vmem, size = 0x12000, scoped, tag = 'internal scratch']
  #allocation2 [shape = 'f32[1,1]{1,0:T(1,128)S(1)}', space=vmem, size = 0x200, scoped, tag = 'scoped memory for tpu_custom_call.1']
  #allocation3 [shape = 'f32[1,1]{1,0:T(1,128)S(1)}', space=vmem, size = 0x200, scoped, tag = 'scoped memory for tpu_custom_call.1']
  %s0 = inlined_call_operand.vmem [shape: f32[32,16], index: 0, kind: input, shape index: {}]
  %s1 = inlined_call_operand.<no memory space> [shape: f32[1,1], index: 1, kind: input, shape index: {}]
  %s2 = inlined_call_operand.<no memory space> [shape: f32[1,1], index: 2, kind: input, shape index: {}]
  %s3 = inlined_call_operand.vmem [shape: f32[32,16], index: 3, kind: output, shape index: {}]
  %s4 = sld [smem:[#allocation0]]
  $region22: #{tpu_custom_call.1} parent=0
    _
  %s6 = ssub.s32 1, %s4
  %s7 = scalar_select 0, %s6, %s4
  %v8 = vstv %s1
  %9 = vst [vmem:[#allocation2] sm:$0x1] %v8
  %v10 = vstv %s2
  %11 = vst [vmem:[#allocation3] sm:$0x1] %v10
  // Predicated region
  $region2: #{tpu_custom_call.1} parent=0 // pred_check
    _
  $region3: #{tpu_custom_call.1} parent=0 // pred_check_branch
    %13 = sbr.rel (0) target = $region5
  $region4: #{tpu_custom_call.1} parent=0 // pred_region
    _
  $region5: #{tpu_custom_call.1} parent=0 // pred_fallthru
    _
  // Predicated region
  $region6: #{tpu_custom_call.1} parent=0 // pred_check
    _
  $region7: #{tpu_custom_call.1} parent=0 // pred_check_branch
    %15 = sbr.rel (0) target = $region9
  $region8: #{tpu_custom_call.1} parent=0 // pred_region
    _
  $region9: #{tpu_custom_call.1} parent=0 // pred_fallthru
    _
  // Predicated region
  $region10: #{tpu_custom_call.1} parent=0 // pred_check
    _
  $region11: #{tpu_custom_call.1} parent=0 // pred_check_branch
    %17 = sbr.rel (0) target = $region13
  $region12: #{tpu_custom_call.1} parent=0 // pred_region
    _
  $region13: #{tpu_custom_call.1} parent=0 // pred_fallthru
    _
  %v18 = vld [vmem:[%s0] sm:$0xff]
  %v19 = vld [vmem:[%s0 + $0x8] sm:$0xff]
  %v20 = vld [vmem:[%s0 + $0x10] sm:$0xff]
  %v21 = vld [vmem:[%s0 + $0x18] sm:$0xff]
  %vm22 = vcmask 130048
  %v23 = vsel %vm22, %v18, 0.0
  %24 = vadd.xlane.f32.xlu0 %v23
  %v25 = vpop.xlane.xlu0 %24
  %v26 = vsel %vm22, %v19, 0.0
  %27 = vadd.xlane.f32.xlu0 %v26
  %v28 = vpop.xlane.xlu0 %27
  %v29 = vsel %vm22, %v20, 0.0
  %30 = vadd.xlane.f32.xlu0 %v29
  %v31 = vpop.xlane.xlu0 %30
  %v32 = vsel %vm22, %v21, 0.0
  %33 = vadd.xlane.f32.xlu0 %v32
  %v34 = vpop.xlane.xlu0 %33
  %v35 = vadd.f32 %v25, %v28
  %v36 = vadd.f32 %v35, %v31
  %v37 = vadd.f32 %v36, %v34
  %v38 = vrot.slane %v37, 4
  %v39 = vadd.f32 %v37, %v38
  %v40 = vrot.slane %v39, 2
  %v41 = vadd.f32 %v39, %v40
  %v42 = vrot.slane %v41, 1
  %v43 = vadd.f32 %v41, %v42
  %v44 = vmul.f32 %v43, 0.001953125
  %v45 = vsub.f32 %v18, %v44
  %v46 = vsub.f32 %v19, %v44
  %v47 = vsub.f32 %v20, %v44
  %v48 = vsub.f32 %v21, %v44
  %v49 = vmul.f32 %v45, %v45
  %v50 = vmul.f32 %v46, %v46
  %v51 = vmul.f32 %v47, %v47
  %v52 = vmul.f32 %v48, %v48
  %v53 = vsel %vm22, %v49, 0.0
  %54 = vadd.xlane.f32.xlu0 %v53
  %v55 = vpop.xlane.xlu0 %54
  %v56 = vsel %vm22, %v50, 0.0
  %57 = vadd.xlane.f32.xlu0 %v56
  %v58 = vpop.xlane.xlu0 %57
  %v59 = vsel %vm22, %v51, 0.0
  %60 = vadd.xlane.f32.xlu0 %v59
  %v61 = vpop.xlane.xlu0 %60
  %v62 = vsel %vm22, %v52, 0.0
  %63 = vadd.xlane.f32.xlu0 %v62
  %v64 = vpop.xlane.xlu0 %63
  %v65 = vadd.f32 %v55, %v58
  %v66 = vadd.f32 %v65, %v61
  %v67 = vadd.f32 %v66, %v64
  %v68 = vrot.slane %v67, 4
  %v69 = vadd.f32 %v67, %v68
  %v70 = vrot.slane %v69, 2
  %v71 = vadd.f32 %v69, %v70
  %v72 = vrot.slane %v71, 1
  %v73 = vadd.f32 %v71, %v72
  %v74 = vmul.f32 %v73, 0.001953125
  %v75 = vld [vmem:[#allocation2] sm:$0x1]
  %v76 = vadd.f32 %v74, 1e-05
  %v77 = vrsqrt.pop %v76
  %v78 = vmul.f32 %v75, %v77
  %v80 = vlaneseq
  %v81 = vshrl.u32 %v80, 7
  %v82 = vsub.s32 0, %v81
  %v83 = vrot.slane %v78, %v82
  %84 = vset.pattern.permute.xlu0 0
  %85 = vperm.xlu0 %84, %v83
  %v86 = vpop.permute.xlu0 %85
  %v88 = vmul.f32 %v45, %v86
  %v89 = vmul.f32 %v46, %v86
  %v90 = vmul.f32 %v47, %v86
  %v91 = vmul.f32 %v48, %v86
  %v92 = vld [vmem:[#allocation3] sm:$0x1]
  %v94 = vlaneseq
  %v95 = vshrl.u32 %v94, 7
  %v96 = vsub.s32 0, %v95
  %v97 = vrot.slane %v92, %v96
  %98 = vset.pattern.permute.xlu0 0
  %99 = vperm.xlu0 %98, %v97
  %v100 = vpop.permute.xlu0 %99
  %v102 = vadd.f32 %v88, %v100
  %v103 = vadd.f32 %v89, %v100
  %v104 = vadd.f32 %v90, %v100
  %v105 = vadd.f32 %v91, %v100
  %106 = vst.msk [vmem:[%s3] sm:$0xff] %vm22, %v102
  %107 = vst.msk [vmem:[%s3 + $0x8] sm:$0xff] %vm22, %v103
  %108 = vst.msk [vmem:[%s3 + $0x10] sm:$0xff] %vm22, %v104
  %109 = vst.msk [vmem:[%s3 + $0x18] sm:$0xff] %vm22, %v105
  // Predicated region
  $region14: #{tpu_custom_call.1} parent=0 // pred_check
    _
  $region15: #{tpu_custom_call.1} parent=0 // pred_check_branch
    %111 = sbr.rel (0) target = $region17
  $region16: #{tpu_custom_call.1} parent=0 // pred_region
    _
  $region17: #{tpu_custom_call.1} parent=0 // pred_fallthru
    _
  // Predicated region
  $region18: #{tpu_custom_call.1} parent=0 // pred_check
    _
  $region19: #{tpu_custom_call.1} parent=0 // pred_check_branch
    %113 = sbr.rel (0) target = $region21
  $region20: #{tpu_custom_call.1} parent=0 // pred_region
    _
  $region21: #{tpu_custom_call.1} parent=0 // pred_fallthru
    _

</llo_original>
